<compile_context>
chip_gen: v6e
topology: v6e:2x2x1
jax: 0.10.0
libtpu: 0.0.40
codegen_flags: <defaults>
</compile_context>

<pallas_src>
import jax
import jax.numpy as jnp
from jax.experimental import pallas as pl
from jax.experimental.pallas import tpu as pltpu


def _round_up(x, m):
    return ((x + m - 1) // m) * m


# --------------------------------------------------------------------------
# Pallas kernel: one (Cout, K) x (K, TM) matmul per pixel tile, fused
# BN-affine (+residual) (+ReLU) epilogue.
# --------------------------------------------------------------------------
def _make_conv_bn_kernel(apply_relu: bool, has_residual: bool):
    def kernel(*refs):
        if has_residual:
            x_ref, w_ref, scale_ref, bias_ref, res_ref, o_ref = refs
        else:
            x_ref, w_ref, scale_ref, bias_ref, o_ref = refs
            res_ref = None

        # (Cout, K) @ (K, TM) -> (Cout, TM); pixels are lane-dense.
        y = jnp.dot(w_ref[...], x_ref[...], preferred_element_type=jnp.float32)
        # Fused eval-mode BatchNorm (+ folded conv bias), per-channel.
        y = y * scale_ref[...] + bias_ref[...]
        if has_residual:
            y = y + res_ref[...]
        if apply_relu:
            y = jnp.maximum(y, 0.0)
        o_ref[...] = y.astype(o_ref.dtype)

    return kernel


def conv3x3_bn(x_nchw, w_oihw, conv_b, gamma, beta, run_mean, run_var,
               *, apply_relu, residual_nchw=None, eps=1e-5, tile_pixels=2048):
    """3x3 conv (stride 1, pad 1) + eval-mode BN (+residual) (+ReLU), NCHW."""
    N, Cin, H, W = x_nchw.shape
    Cout, _, KH, KW = w_oihw.shape
    P = N * H * W
    K = KH * KW * Cin

    # Fold conv bias + BN running stats into per-channel scale/bias.
    scale = (gamma / jnp.sqrt(run_var + eps)).astype(jnp.float32)     # (Cout,)
    bias = ((conv_b - run_mean) * scale + beta).astype(jnp.float32)   # (Cout,)
    scale2 = scale.reshape(Cout, 1)
    bias2 = bias.reshape(Cout, 1)

    # im2col glue (plain JAX) in (K, P) layout:
    #   K index = (kh*KW + kw)*Cin + ci ;  P index = (n*H + h)*W + w
    xp = jnp.pad(x_nchw.astype(jnp.float32), ((0, 0), (0, 0), (1, 1), (1, 1)))
    views = jnp.stack(
        [xp[:, :, kh:kh + H, kw:kw + W] for kh in range(KH) for kw in range(KW)],
        axis=0,
    )                                                       # (9, N, Cin, H, W)
    xcol = jnp.transpose(views, (0, 2, 1, 3, 4)).reshape(K, P)

    # PyTorch weight (Cout, Cin, kh, kw) -> (Cout, K), matching (kh,kw,ci) order.
    w2 = jnp.transpose(w_oihw, (0, 2, 3, 1)).reshape(Cout, K).astype(jnp.float32)

    # Tile the pixel (lane) dimension; TM is a multiple of 128.
    TM = min(tile_pixels, _round_up(P, 128))
    P_pad = _round_up(P, TM)
    if P_pad != P:
        xcol = jnp.pad(xcol, ((0, 0), (0, P_pad - P)))

    args = [xcol, w2, scale2, bias2]
    in_specs = [
        pl.BlockSpec((K, TM), lambda i: (0, i)),        # one DMA per pixel tile
        pl.BlockSpec((Cout, K), lambda i: (0, 0)),      # weights resident
        pl.BlockSpec((Cout, 1), lambda i: (0, 0)),      # scale resident
        pl.BlockSpec((Cout, 1), lambda i: (0, 0)),      # bias resident
    ]

    has_residual = residual_nchw is not None
    if has_residual:
        res = jnp.transpose(residual_nchw.astype(jnp.float32),
                            (1, 0, 2, 3)).reshape(Cout, P)
        if P_pad != P:
            res = jnp.pad(res, ((0, 0), (0, P_pad - P)))
        args.append(res)
        in_specs.append(pl.BlockSpec((Cout, TM), lambda i: (0, i)))

    flops = 2 * P_pad * K * Cout
    bytes_accessed = 4 * (K * P_pad + Cout * K + 2 * Cout + Cout * P_pad
                          + (Cout * P_pad if has_residual else 0))

    out = pl.pallas_call(
        _make_conv_bn_kernel(apply_relu, has_residual),
        out_shape=jax.ShapeDtypeStruct((Cout, P_pad), jnp.float32),
        grid_spec=pltpu.PrefetchScalarGridSpec(
            num_scalar_prefetch=0,
            grid=(P_pad // TM,),                   # pixel tiles (parallel)
            in_specs=in_specs,
            out_specs=pl.BlockSpec((Cout, TM), lambda i: (0, i)),
        ),
        compiler_params=pltpu.CompilerParams(
            dimension_semantics=("parallel",),     # shards across TCs on v7x
            vmem_limit_bytes=32 * 1024 * 1024,     # safe on v7x's 64 MiB VMEM
        ),
        cost_estimate=pl.CostEstimate(
            flops=flops, transcendentals=0, bytes_accessed=bytes_accessed),
    )(*args)

    out = out[:, :P].reshape(Cout, N, H, W)
    return jnp.transpose(out, (1, 0, 2, 3))        # back to NCHW


# --------------------------------------------------------------------------
# Parameter init (deterministic, synthetic) and the Resnet forward pass
# --------------------------------------------------------------------------
def make_resnet_params(key, in_channels, out_channels, kernel_size):
    assert kernel_size == 3, "padding=1 preserves spatial dims only for k=3"
    ks = jax.random.split(key, 6)

    def conv_w(k, cout, cin):
        return 0.1 * jax.random.normal(
            k, (cout, cin, kernel_size, kernel_size), jnp.float32)

    def bn_params(k, c):
        k1, k2, k3, k4 = jax.random.split(k, 4)
        gamma = 1.0 + 0.1 * jax.random.normal(k1, (c,), jnp.float32)
        beta = 0.1 * jax.random.normal(k2, (c,), jnp.float32)
        mean = 0.1 * jax.random.normal(k3, (c,), jnp.float32)
        var = 1.0 + 0.1 * jnp.abs(jax.random.normal(k4, (c,), jnp.float32))
        return gamma, beta, mean, var

    return {
        "conv1_w": conv_w(ks[0], out_channels, in_channels),
        "conv1_b": 0.1 * jax.random.normal(ks[1], (out_channels,), jnp.float32),
        "bn1": bn_params(ks[2], out_channels),
        "conv2_w": conv_w(ks[3], out_channels, out_channels),
        "conv2_b": 0.1 * jax.random.normal(ks[4], (out_channels,), jnp.float32),
        "bn2": bn_params(ks[5], out_channels),
    }


def resnet_forward(params, x_nchw, flag=2):
    # Only the flag == 2 (_conv_style1) branch is implemented (see TODO above).
    assert flag == 2
    N, Cin, H, W = x_nchw.shape
    Cout = params["conv1_w"].shape[0]
    assert Cin == Cout, "identity residual requires in_channels == out_channels"

    x = x_nchw.astype(jnp.float32)
    g1, b1, m1, v1 = params["bn1"]
    y1 = conv3x3_bn(x, params["conv1_w"], params["conv1_b"],
                    g1, b1, m1, v1, apply_relu=True)
    g2, b2, m2, v2 = params["bn2"]
    y2 = conv3x3_bn(y1, params["conv2_w"], params["conv2_b"],
                    g2, b2, m2, v2, apply_relu=True, residual_nchw=x)
    return y2                                           # NCHW


# --------------------------------------------------------------------------
# Pure-JAX reference (for a sanity check only)
# --------------------------------------------------------------------------
def _ref_forward(params, x_nchw, eps=1e-5):
    def conv_bn(x, w, b, bn, relu, res=None):
        g, be, m, v = bn
        y = jax.lax.conv_general_dilated(
            x, w, (1, 1), ((1, 1), (1, 1)),
            dimension_numbers=("NCHW", "OIHW", "NCHW"))
        y = y + b[None, :, None, None]
        y = (y - m[None, :, None, None]) / jnp.sqrt(v[None, :, None, None] + eps)
        y = y * g[None, :, None, None] + be[None, :, None, None]
        if res is not None:
            y = y + res
        return jnp.maximum(y, 0.0) if relu else y

    y1 = conv_bn(x_nchw, params["conv1_w"], params["conv1_b"],
                 params["bn1"], True)
    return conv_bn(y1, params["conv2_w"], params["conv2_b"],
                   params["bn2"], True, res=x_nchw)


if __name__ == "__main__":
    key = jax.random.PRNGKey(0)
    kp, kx = jax.random.split(key)

    in_channels = out_channels = 4
    N, H, W = 2, 16, 16
    kernel_size, flag = 3, 2

    params = make_resnet_params(kp, in_channels, out_channels, kernel_size)
    x = jax.random.normal(kx, (N, in_channels, H, W), jnp.float32)

    out = jax.block_until_ready(resnet_forward(params, x, flag=flag))
    ref = jax.block_until_ready(_ref_forward(params, x))

    assert out.shape == (N, out_channels, H, W)
    max_err = float(jnp.max(jnp.abs(out - ref)))
    if max_err < 1e-3:
        print("KERNEL_OK")
    else:
        print(f"MISMATCH max_abs_err={max_err}")
</pallas_src>

<mosaic_0001>
module attributes {stable_mosaic.version = 11 : i64} {
  func.func @kernel(%arg0: i32, %arg1: memref<36x512xf32, #tpu.memory_space<vmem>>, %arg2: memref<4x36xf32, #tpu.memory_space<vmem>>, %arg3: memref<4x1xf32, #tpu.memory_space<vmem>>, %arg4: memref<4x1xf32, #tpu.memory_space<vmem>>, %arg5: memref<4x512xf32, #tpu.memory_space<vmem>>) attributes {dimension_semantics = [#tpu.dimension_semantics<parallel>], iteration_bounds = array<i64: 1>, scalar_prefetch = 0 : i64, scratch_operands = 0 : i64, tpu.core_type = #tpu.core_type<tc>, window_params = [{transform_indices = @transform_0, window_bounds = array<i64: 36, 512>}, {pipeline_mode = #tpu.pipeline_mode<synchronous>, transform_indices = @transform_1, window_bounds = array<i64: 4, 36>}, {pipeline_mode = #tpu.pipeline_mode<synchronous>, transform_indices = @transform_2, window_bounds = array<i64: 4, 1>}, {pipeline_mode = #tpu.pipeline_mode<synchronous>, transform_indices = @transform_3, window_bounds = array<i64: 4, 1>}, {transform_indices = @transform_4, window_bounds = array<i64: 4, 512>}]} {
    %c0 = arith.constant 0 : index
    %c0_0 = arith.constant 0 : index
    %0 = vector.load %arg2[%c0, %c0_0] : memref<4x36xf32, #tpu.memory_space<vmem>>, vector<4x36xf32>
    %c0_1 = arith.constant 0 : index
    %c0_2 = arith.constant 0 : index
    %1 = vector.load %arg1[%c0_1, %c0_2] : memref<36x512xf32, #tpu.memory_space<vmem>>, vector<36x512xf32>
    %cst = arith.constant dense<0.000000e+00> : vector<4x512xf32>
    %2 = tpu.matmul %0, %1, %cst {dimension_numbers = #tpu.dot_dimension_numbers<[1], [0], [0], [1], [0, 0, 1, 1], [], []>} : vector<4x36xf32>, vector<36x512xf32>, vector<4x512xf32> -> vector<4x512xf32>
    %c0_3 = arith.constant 0 : index
    %c0_4 = arith.constant 0 : index
    %3 = vector.load %arg3[%c0_3, %c0_4] : memref<4x1xf32, #tpu.memory_space<vmem>>, vector<4x1xf32>
    %4 = vector.broadcast %3 : vector<4x1xf32> to vector<4x512xf32>
    %5 = arith.mulf %2, %4 : vector<4x512xf32>
    %c0_5 = arith.constant 0 : index
    %c0_6 = arith.constant 0 : index
    %6 = vector.load %arg4[%c0_5, %c0_6] : memref<4x1xf32, #tpu.memory_space<vmem>>, vector<4x1xf32>
    %7 = vector.broadcast %6 : vector<4x1xf32> to vector<4x512xf32>
    %8 = arith.addf %5, %7 : vector<4x512xf32>
    %cst_7 = arith.constant 0.000000e+00 : f32
    %9 = vector.broadcast %cst_7 : f32 to vector<4x512xf32>
    %10 = arith.maximumf %8, %9 : vector<4x512xf32>
    %c0_8 = arith.constant 0 : index
    %c0_9 = arith.constant 0 : index
    %11 = vector.load %arg5[%c0_8, %c0_9] : memref<4x512xf32, #tpu.memory_space<vmem>>, vector<4x512xf32>
    tpu.vector_store %arg5[%c0_8, %c0_9], %10 {strides = array<i32>} : memref<4x512xf32, #tpu.memory_space<vmem>>, vector<4x512xf32>,
    return
  }
  func.func @transform_0(%arg0: i32) -> (i32, i32) {
    %c0_i32 = arith.constant 0 : i32
    %c0_i32_0 = arith.constant 0 : i32
    return %c0_i32, %arg0 : i32, i32
  }
  func.func @transform_1(%arg0: i32) -> (i32, i32) {
    %c0_i32 = arith.constant 0 : i32
    %c0_i32_0 = arith.constant 0 : i32
    %c0_i32_1 = arith.constant 0 : i32
    return %c0_i32, %c0_i32_0 : i32, i32
  }
  func.func @transform_2(%arg0: i32) -> (i32, i32) {
    %c0_i32 = arith.constant 0 : i32
    %c0_i32_0 = arith.constant 0 : i32
    %c0_i32_1 = arith.constant 0 : i32
    return %c0_i32, %c0_i32_0 : i32, i32
  }
  func.func @transform_3(%arg0: i32) -> (i32, i32) {
    %c0_i32 = arith.constant 0 : i32
    %c0_i32_0 = arith.constant 0 : i32
    %c0_i32_1 = arith.constant 0 : i32
    return %c0_i32, %c0_i32_0 : i32, i32
  }
  func.func @transform_4(%arg0: i32) -> (i32, i32) {
    %c0_i32 = arith.constant 0 : i32
    %c0_i32_0 = arith.constant 0 : i32
    return %c0_i32, %arg0 : i32, i32
  }
}

</mosaic_0001>

<llo_original>
// kernel: tpu_custom_call.1
$region0: #{tpu_custom_call.1}
  #allocation0 [shape = 'u32[]', space=smem, size = 0x4, offset = 0x4, fixed_abs, tag = 'smem constant byte address 0x4 - core index']
  #allocation1 [shape = 'u32[144,128]{1,0:T(1,128)}', space=vmem, size = 0x12000, scoped, tag = 'internal scratch']
  %s0 = inlined_call_operand.hbm [shape: f32[36,512], index: 0, kind: input, shape index: {}]
  %s1 = inlined_call_operand.vmem [shape: f32[4,36], index: 1, kind: input, shape index: {}]
  %s2 = inlined_call_operand.vmem [shape: f32[4,1], index: 2, kind: input, shape index: {}]
  %s3 = inlined_call_operand.vmem [shape: f32[4,1], index: 3, kind: input, shape index: {}]
  %s4 = inlined_call_operand.hbm [shape: f32[4,512], index: 4, kind: output, shape index: {}]
  %s5 = sld [smem:[#allocation0]]
  $region30: #{tpu_custom_call.1} parent=0
    _
  %s7 = ssub.s32 1, %s5
  %s8 = scalar_select 0, %s7, %s5
  $region1: #{tpu_custom_call.1} parent=0
    #allocation2 [shape = 'u8[81920]{0}', space=vmem, size = 0x14000, scoped, tag = 'input window, operand 0, single buffered']
    #allocation3 [shape = 's32[1]{0}', space=sflag, size = 0x4, scoped, tag = 'scoped memory for tpu_custom_call.1']
    #allocation4 [shape = 's32[1]{0}', space=sflag, size = 0x4, scoped, tag = 'scoped memory for tpu_custom_call.1']
    #allocation5 [shape = 'u8[8192]{0}', space=vmem, size = 0x2000, scoped, tag = 'output window, operand 0, single buffered']
    %9 = vsyncpa [#allocation3], 0
    %10 = vsyncpa [#allocation4], 0
    // Predicated region
    $region2: #{tpu_custom_call.1} parent=1 // pred_check
      _
    $region3: #{tpu_custom_call.1} parent=1 // pred_check_branch
      %12 = sbr.rel (0) target = $region5
    $region4: #{tpu_custom_call.1} parent=1 // pred_region
      %s14 = ssub.s32 2560, 2560
      %15 = vsyncadd [#allocation3], %s14
      %s16 = sshll.u32 [#allocation2], 4
      %s17 = int_to_ptr.vmem [resolvable:$true] %s16
      %22 = dma.hbm_to_vmem [thread:$0]  %s0, 2560, %s17, [#allocation3], 512, 512, 32
    $region5: #{tpu_custom_call.1} parent=1 // pred_fallthru
      _
    // Predicated region
    $region6: #{tpu_custom_call.1} parent=1 // pred_check
      _
    $region7: #{tpu_custom_call.1} parent=1 // pred_check_branch
      %24 = sbr.rel (0) target = $region9
    $region8: #{tpu_custom_call.1} parent=1 // pred_region
      _
    $region9: #{tpu_custom_call.1} parent=1 // pred_fallthru
      _
    // Predicated region
    $region10: #{tpu_custom_call.1} parent=1 // pred_check
      _
    $region11: #{tpu_custom_call.1} parent=1 // pred_check_branch
      %26 = sbr.rel (0) target = $region13
    $region12: #{tpu_custom_call.1} parent=1 // pred_region
      _
    $region13: #{tpu_custom_call.1} parent=1 // pred_fallthru
      _
    // Predicated region
    $region14: #{tpu_custom_call.1} parent=1 // pred_check
      _
    $region15: #{tpu_custom_call.1} parent=1 // pred_check_branch
      %28 = sbr.rel (0) target = $region17
    $region16: #{tpu_custom_call.1} parent=1 // pred_region
      _
    $region17: #{tpu_custom_call.1} parent=1 // pred_fallthru
      _
    // Predicated region
    $region18: #{tpu_custom_call.1} parent=1 // pred_check
      _
    $region19: #{tpu_custom_call.1} parent=1 // pred_check_branch
      %30 = sbr.rel (0) target = $region21
    $region20: #{tpu_custom_call.1} parent=1 // pred_region
      %31 = dma.done [#allocation3], 2560
    $region21: #{tpu_custom_call.1} parent=1 // pred_fallthru
      _
    %v32 = vld [vmem:[%s1] sm:$0xf]
    %v33 = vld [vmem:[#allocation2] sm:$0xff]
    %v34 = vld [vmem:[#allocation2 + $0x8] sm:$0xff]
    %v35 = vld [vmem:[#allocation2 + $0x10] sm:$0xff]
    %v36 = vld [vmem:[#allocation2 + $0x18] sm:$0xff]
    %v37 = vld [vmem:[#allocation2 + $0x20] sm:$0xff]
    %v38 = vld [vmem:[#allocation2 + $0x28] sm:$0xff]
    %v39 = vld [vmem:[#allocation2 + $0x30] sm:$0xff]
    %v40 = vld [vmem:[#allocation2 + $0x38] sm:$0xff]
    %v41 = vld [vmem:[#allocation2 + $0x40] sm:$0xff]
    %v42 = vld [vmem:[#allocation2 + $0x48] sm:$0xff]
    %v43 = vld [vmem:[#allocation2 + $0x50] sm:$0xff]
    %v44 = vld [vmem:[#allocation2 + $0x58] sm:$0xff]
    %v45 = vld [vmem:[#allocation2 + $0x60] sm:$0xff]
    %v46 = vld [vmem:[#allocation2 + $0x68] sm:$0xff]
    %v47 = vld [vmem:[#allocation2 + $0x70] sm:$0xff]
    %v48 = vld [vmem:[#allocation2 + $0x78] sm:$0xff]
    %v49 = vld [vmem:[#allocation2 + $0x80] sm:$0xf]
    %v50 = vld [vmem:[#allocation2 + $0x88] sm:$0xf]
    %v51 = vld [vmem:[#allocation2 + $0x90] sm:$0xf]
    %v52 = vld [vmem:[#allocation2 + $0x98] sm:$0xf]
    %vm53 = vcmask 293888
    %v55 = vsel %vm53, %v32, 0
    %vm57 = vcmask 1043456
    %v59 = vsel %vm57, %v49, 0
    %v62 = vsel %vm57, %v50, 0
    %v65 = vsel %vm57, %v51, 0
    %v68 = vsel %vm57, %v52, 0
    %70 = vmatprep.subr.mxu0 0.0
    %71 = vmatpush1.msra.mxu0 0.0
    %72 = vmatprep.subr.mxu0 0.0
    %73 = vmatpush1.msra.mxu0 0.0
    %74 = vmatprep.subr.mxu0 0.0
    %75 = vmatpush1.msra.mxu0 0.0
    %76 = vmatprep.subr.mxu0 0.0
    %77 = vmatpush1.msra.mxu0 0.0
    %78 = vmatprep.subr.mxu0 0.0
    %79 = vmatpush1.msra.mxu0 0.0
    %80 = vmatprep.subr.mxu0 0.0
    %81 = vmatpush1.msra.mxu0 0.0
    %82 = vmatprep.subr.mxu0 0.0
    %83 = vmatpush1.msra.mxu0 0.0
    %84 = vmatprep.subr.mxu0 0.0
    %85 = vmatpush1.msra.mxu0 0.0
    %86 = vmatprep.subr.mxu0 0.0
    %87 = vmatpush1.msra.mxu0 0.0
    %88 = vmatprep.subr.mxu0 0.0
    %89 = vmatpush1.msra.mxu0 0.0
    %90 = vmatprep.subr.mxu0 0.0
    %91 = vmatpush1.msra.mxu0 0.0
    %92 = vmatprep.subr.mxu0 %v62
    %93 = vmatpush1.msra.mxu0 %v59
    %94 = vmatprep.subr.mxu0 %v46
    %95 = vmatpush1.msra.mxu0 %v45
    %96 = vmatprep.subr.mxu0 %v42
    %97 = vmatpush1.msra.mxu0 %v41
    %98 = vmatprep.subr.mxu0 %v38
    %99 = vmatpush1.msra.mxu0 %v37
    %100 = vmatprep.subr.mxu0 %v34
    %101 = vmatpush1.msra.mxu0 %v33
    %102 = vmatprep.subr.mxu0 0.0
    %103 = vmatpush2.msra.mxu0 0.0
    %104 = vmatprep.subr.mxu0 0.0
    %105 = vmatpush2.msra.mxu0 0.0
    %106 = vmatprep.subr.mxu0 0.0
    %107 = vmatpush2.msra.mxu0 0.0
    %108 = vmatprep.subr.mxu0 0.0
    %109 = vmatpush2.msra.mxu0 0.0
    %110 = vmatprep.subr.mxu0 0.0
    %111 = vmatpush2.msra.mxu0 0.0
    %112 = vmatprep.subr.mxu0 0.0
    %113 = vmatpush2.msra.mxu0 0.0
    %114 = vmatprep.subr.mxu0 0.0
    %115 = vmatpush2.msra.mxu0 0.0
    %116 = vmatprep.subr.mxu0 0.0
    %117 = vmatpush2.msra.mxu0 0.0
    %118 = vmatprep.subr.mxu0 0.0
    %119 = vmatpush2.msra.mxu0 0.0
    %120 = vmatprep.subr.mxu0 0.0
    %121 = vmatpush2.msra.mxu0 0.0
    %122 = vmatprep.subr.mxu0 0.0
    %123 = vmatpush2.msra.mxu0 0.0
    %124 = vmatprep.subr.mxu0 0.0
    %125 = vmatpush2.msra.mxu0 0.0
    %126 = vmatprep.subr.mxu0 0.0
    %127 = vmatpush2.msra.mxu0 0.0
    %128 = vmatprep.subr.mxu0 0.0
    %129 = vmatpush2.msra.mxu0 0.0
    %130 = vmatprep.subr.mxu0 0.0
    %131 = vmatpush2.msra.mxu0 0.0
    %132 = vmatprep.subr.mxu0 0.0
    %133 = vmatpush2.msra.mxu0 0.0
    %134 = vmatprep.mubr.f32.mxu0 0.0
    %135 = vmatmul.mubr.f32.gmra.mxu0 %v55
    %v136 = vpop.f32.mrf.mxu0
    %v137 = vadd.f32 0.0, %v136
    %v138 = vpop.f32.mrf.mxu0
    %v139 = vadd.f32 0.0, %v138
    %140 = vdwg.mxu0
    %141 = vmatprep.subr.mxu0 0.0
    %142 = vmatpush1.msra.mxu0 0.0
    %143 = vmatprep.subr.mxu0 0.0
    %144 = vmatpush1.msra.mxu0 0.0
    %145 = vmatprep.subr.mxu0 0.0
    %146 = vmatpush1.msra.mxu0 0.0
    %147 = vmatprep.subr.mxu0 0.0
    %148 = vmatpush1.msra.mxu0 0.0
    %149 = vmatprep.subr.mxu0 0.0
    %150 = vmatpush1.msra.mxu0 0.0
    %151 = vmatprep.subr.mxu0 0.0
    %152 = vmatpush1.msra.mxu0 0.0
    %153 = vmatprep.subr.mxu0 0.0
    %154 = vmatpush1.msra.mxu0 0.0
    %155 = vmatprep.subr.mxu0 0.0
    %156 = vmatpush1.msra.mxu0 0.0
    %157 = vmatprep.subr.mxu0 0.0
    %158 = vmatpush1.msra.mxu0 0.0
    %159 = vmatprep.subr.mxu0 0.0
    %160 = vmatpush1.msra.mxu0 0.0
    %161 = vmatprep.subr.mxu0 0.0
    %162 = vmatpush1.msra.mxu0 0.0
    %163 = vmatprep.subr.mxu0 %v68
    %164 = vmatpush1.msra.mxu0 %v65
    %165 = vmatprep.subr.mxu0 %v48
    %166 = vmatpush1.msra.mxu0 %v47
    %167 = vmatprep.subr.mxu0 %v44
    %168 = vmatpush1.msra.mxu0 %v43
    %169 = vmatprep.subr.mxu0 %v40
    %170 = vmatpush1.msra.mxu0 %v39
    %171 = vmatprep.subr.mxu0 %v36
    %172 = vmatpush1.msra.mxu0 %v35
    %173 = vmatprep.subr.mxu0 0.0
    %174 = vmatpush2.msra.mxu0 0.0
    %175 = vmatprep.subr.mxu0 0.0
    %176 = vmatpush2.msra.mxu0 0.0
    %177 = vmatprep.subr.mxu0 0.0
    %178 = vmatpush2.msra.mxu0 0.0
    %179 = vmatprep.subr.mxu0 0.0
    %180 = vmatpush2.msra.mxu0 0.0
    %181 = vmatprep.subr.mxu0 0.0
    %182 = vmatpush2.msra.mxu0 0.0
    %183 = vmatprep.subr.mxu0 0.0
    %184 = vmatpush2.msra.mxu0 0.0
    %185 = vmatprep.subr.mxu0 0.0
    %186 = vmatpush2.msra.mxu0 0.0
    %187 = vmatprep.subr.mxu0 0.0
    %188 = vmatpush2.msra.mxu0 0.0
    %189 = vmatprep.subr.mxu0 0.0
    %190 = vmatpush2.msra.mxu0 0.0
    %191 = vmatprep.subr.mxu0 0.0
    %192 = vmatpush2.msra.mxu0 0.0
    %193 = vmatprep.subr.mxu0 0.0
    %194 = vmatpush2.msra.mxu0 0.0
    %195 = vmatprep.subr.mxu0 0.0
    %196 = vmatpush2.msra.mxu0 0.0
    %197 = vmatprep.subr.mxu0 0.0
    %198 = vmatpush2.msra.mxu0 0.0
    %199 = vmatprep.subr.mxu0 0.0
    %200 = vmatpush2.msra.mxu0 0.0
    %201 = vmatprep.subr.mxu0 0.0
    %202 = vmatpush2.msra.mxu0 0.0
    %203 = vmatprep.subr.mxu0 0.0
    %204 = vmatpush2.msra.mxu0 0.0
    %205 = vmatprep.mubr.f32.mxu0 0.0
    %206 = vmatmul.mubr.f32.gmra.mxu0 %v55
    %v207 = vpop.f32.mrf.mxu0
    %v208 = vadd.f32 0.0, %v207
    %v209 = vpop.f32.mrf.mxu0
    %v210 = vadd.f32 0.0, %v209
    %211 = vdwg.mxu0
    %v212 = vld [vmem:[%s2] sm:$0xf]
    %214 = vset.pattern.permute.xlu0 0
    %215 = vperm.xlu0 %214, %v212
    %v216 = vpop.permute.xlu0 %215
    %v218 = vmul.f32 %v137, %v216
    %v219 = vmul.f32 %v139, %v216
    %v220 = vmul.f32 %v208, %v216
    %v221 = vmul.f32 %v210, %v216
    %v222 = vld [vmem:[%s3] sm:$0xf]
    %224 = vset.pattern.permute.xlu0 0
    %225 = vperm.xlu0 %224, %v222
    %v226 = vpop.permute.xlu0 %225
    %v228 = vadd.f32 %v218, %v226
    %v229 = vadd.f32 %v219, %v226
    %v230 = vadd.f32 %v220, %v226
    %v231 = vadd.f32 %v221, %v226
    %v232 = vmax.f32 %v228, 0.0
    %v233 = vmax.f32 %v229, 0.0
    %v234 = vmax.f32 %v230, 0.0
    %v235 = vmax.f32 %v231, 0.0
    %v240 = vcombine.low %v232, %v233
    %v241 = vcombine.low %v234, %v235
    %244 = vst [vmem:[#allocation5] sm:$0xff] %v240
    %245 = vst [vmem:[#allocation5 + $0x8] sm:$0xff] %v241
    // Predicated region
    $region22: #{tpu_custom_call.1} parent=1 // pred_check
      _
    $region23: #{tpu_custom_call.1} parent=1 // pred_check_branch
      %247 = sbr.rel (0) target = $region25
    $region24: #{tpu_custom_call.1} parent=1 // pred_region
      %s249 = ssub.s32 256, 256
      %250 = vsyncadd [#allocation4], %s249
      %s252 = sshll.u32 [#allocation5], 4
      %s253 = int_to_ptr.vmem [resolvable:$true] %s252
      %255 = dma.vmem_to_hbm [thread:$0]  %s253, 256, %s4, [#allocation4]
    $region25: #{tpu_custom_call.1} parent=1 // pred_fallthru
      _
    // Predicated region
    $region26: #{tpu_custom_call.1} parent=1 // pred_check
      _
    $region27: #{tpu_custom_call.1} parent=1 // pred_check_branch
      %257 = sbr.rel (0) target = $region29
    $region28: #{tpu_custom_call.1} parent=1 // pred_region
      %258 = dma.done [#allocation4], 256
    $region29: #{tpu_custom_call.1} parent=1 // pred_fallthru
      _
    %259 = vsyncpa [#allocation3], 1
    %260 = vsyncpa [#allocation4], 1

</llo_original>
